<compile_context>
chip_gen: v6e
topology: v6e:2x2x1
jax: 0.10.0
libtpu: 0.0.40
codegen_flags: <defaults>
</compile_context>

<pallas_src>
import jax
import jax.numpy as jnp
from jax.experimental import pallas as pl
from jax.experimental.pallas import tpu as pltpu


_LANE_CANDIDATES = (8192, 4096, 2048, 1024, 512, 256, 128)


def _round_up(x, m):
    return ((x + m - 1) // m) * m


def _round_down(x, m):
    return (x // m) * m


def _sublane_pack(dtype):
    """Dtype-native sublane packing multiple (8 f32, 16 bf16, 32 int8/fp8)."""
    itemsize = jnp.dtype(dtype).itemsize
    return max(8, (4 // max(1, itemsize)) * 8)


def _target_tile_bytes():
    """Generation-aware tile size.

    v7x: ~4 MiB (at ~3.2 TB/s a 2 MiB tile is only ~1.3 us/step, so the
    ~0.35 us per-grid-step overhead would be ~20-25% of wall time; 4 MiB x 4
    double-buffered in/out buffers = 16 MiB, inside v7x's 32 MiB default
    scoped VMEM, so no vmem_limit_bytes bump is required).
    v5e/v6e: 2 MiB (already <10% overhead at 0.8-1.4 TB/s; keeps well inside
    v5e's 16 MiB default scoped VMEM).
    """
    try:
        kind = jax.devices()[0].device_kind.lower()
    except Exception:
        kind = ""
    if "v7" in kind:
        return 4 * 1024 * 1024
    return 2 * 1024 * 1024


def _choose_tile_rows(rows, lane, itemsize, pack, tile_bytes):
    """Pick a tile row count: multiple of `pack`, ~tile_bytes per tile,
    cdiv grid (masked tail), preferring an even grid >= 4 steps."""
    if rows <= pack:
        return rows  # single full-extent block (always legal)
    tr = _round_down(max(pack, tile_bytes // (lane * itemsize)), pack)
    tr = max(pack, tr)
    if tr >= rows:
        return rows
    grid = pl.cdiv(rows, tr)
    # Prefer >= 4 grid steps so the DMA pipeline has work to overlap.
    if grid < 4 and rows >= 4 * pack:
        tr = max(pack, _round_up(pl.cdiv(rows, 4), pack))
        if tr >= rows:
            return rows
        grid = pl.cdiv(rows, tr)
    # Prefer an even grid so ("parallel",) splits evenly across v7x's 2 TCs.
    if grid > 1 and grid % 2 == 1:
        alt = max(pack, _round_up(pl.cdiv(rows, grid + 1), pack))
        if alt < rows and pl.cdiv(rows, alt) % 2 == 0:
            tr = alt
    return tr


def _pick_layout(total, dtype):
    """Lane-dense 2D layout (padded_total, lane, rows, tile_rows)."""
    itemsize = jnp.dtype(dtype).itemsize
    pack = _sublane_pack(dtype)
    padded = _round_up(total, 128)
    lane = 128
    for cand in _LANE_CANDIDATES:
        if padded % cand == 0 and padded // cand >= pack:
            lane = cand
            break
    rows = padded // lane
    tile_rows = _choose_tile_rows(rows, lane, itemsize, pack,
                                  _target_tile_bytes())
    return padded, lane, rows, tile_rows


def _copy_kernel(x_ref, o_ref):
    # Pure passthrough of the current lane-dense (tile_rows, lane) tile.
    o_ref[...] = x_ref[...]


def _pallas_copy_blocked(flat2d, tile_rows, total_bytes, *, donate=False):
    """Blocked, auto-pipelined HBM->VMEM->HBM copy (lane-dense tiles)."""
    rows, lane = flat2d.shape
    grid = (pl.cdiv(rows, tile_rows),)
    return pl.pallas_call(
        _copy_kernel,
        out_shape=jax.ShapeDtypeStruct((rows, lane), flat2d.dtype),
        grid=grid,
        in_specs=[pl.BlockSpec((tile_rows, lane), lambda i: (i, 0))],
        out_specs=pl.BlockSpec((tile_rows, lane), lambda i: (i, 0)),
        compiler_params=pltpu.CompilerParams(
            dimension_semantics=("parallel",)),
        cost_estimate=pl.CostEstimate(
            flops=0, transcendentals=0, bytes_accessed=2 * total_bytes),
        input_output_aliases=({0: 0} if donate else {}),
    )(flat2d)


def _pallas_copy_dma(flat2d, tile_rows, total_bytes, *, n_inflight=4):
    """Pure HBM->HBM chunked DMA copy: no VMEM staging, no per-tile grid body."""
    rows, lane = flat2d.shape
    # Keep the statically-unrolled DMA chain bounded (trace-time cost).
    max_chunks = 256
    if pl.cdiv(rows, tile_rows) > max_chunks:
        tile_rows = _round_up(pl.cdiv(rows, max_chunks), 8)
    n_chunks = pl.cdiv(rows, tile_rows)
    starts = [c * tile_rows for c in range(n_chunks)]
    sizes = [min(tile_rows, rows - s) for s in starts]
    window = min(n_inflight, n_chunks)

    def kernel(x_hbm, o_hbm, sem):
        copies = []
        for c in range(n_chunks):
            cp = pltpu.make_async_copy(
                x_hbm.at[starts[c]:starts[c] + sizes[c], :],
                o_hbm.at[starts[c]:starts[c] + sizes[c], :],
                sem.at[c % window],
            )
            if c >= window:
                copies[c - window].wait()  # free this semaphore slot
            cp.start()
            copies.append(cp)
        for c in range(max(0, n_chunks - window), n_chunks):
            copies[c].wait()

    return pl.pallas_call(
        kernel,
        out_shape=jax.ShapeDtypeStruct((rows, lane), flat2d.dtype),
        in_specs=[pl.BlockSpec(memory_space=pl.ANY)],
        out_specs=pl.BlockSpec(memory_space=pl.ANY),
        scratch_shapes=[pltpu.SemaphoreType.DMA((window,))],
        cost_estimate=pl.CostEstimate(
            flops=0, transcendentals=0, bytes_accessed=2 * total_bytes),
    )(flat2d)


def _materialized_identity(x, *, donate=False, copy_mode="blocked"):
    """Physically materialized copy of x via a lane-dense Pallas kernel."""
    total = int(x.size)
    if total == 0:
        return x
    itemsize = jnp.dtype(x.dtype).itemsize
    padded, lane, rows, tile_rows = _pick_layout(total, x.dtype)

    # Wrapper-side layout plumbing (free): flatten, pad to a multiple of the
    # lane width so every store is an unmasked full-vreg vst, present a
    # lane-dense 2D slab.
    flat = x.reshape(-1)
    if padded != total:
        flat = jnp.pad(flat, (0, padded - total))
    flat2d = flat.reshape(rows, lane)
    total_bytes = padded * itemsize

    if copy_mode == "dma":
        out2d = _pallas_copy_dma(flat2d, tile_rows, total_bytes)
    else:
        out2d = _pallas_copy_blocked(flat2d, tile_rows, total_bytes,
                                     donate=donate)

    out_flat = out2d.reshape(-1)
    if padded != total:
        out_flat = out_flat[:total]
    return out_flat.reshape(x.shape)


def resnet_forward(x: jax.Array, *, materialize: bool = False,
                   donate: bool = False,
                   copy_mode: str = "blocked") -> jax.Array:
    """Pallas implementation of ResNet.forward (identity on NCHW input).

    Fast path (default): the reference forward() is `return input`, so we
    return x with zero HBM traffic — nothing beats that roofline.

    materialize=True forces a physical copy:
      copy_mode="blocked": lane-dense, ~2-4 MiB tiled, double-buffered copy.
      copy_mode="dma":     pure chunked HBM->HBM DMA (no VMEM staging).
      donate=True:         alias the output onto the input buffer
                           (input_output_aliases={0:0}) — only valid when the
                           caller no longer needs x.
    """
    if not materialize:
        return x
    return _materialized_identity(x, donate=donate, copy_mode=copy_mode)


if __name__ == "__main__":
    key = jax.random.PRNGKey(0)
    # Small NCHW input consistent with a Deeplabv3/ResNet image input.
    x = jax.random.normal(key, (2, 4, 16, 16), dtype=jnp.float32)

    # Fast path: identity with no kernel.
    y_fast = resnet_forward(x)
    assert y_fast.shape == x.shape and y_fast.dtype == x.dtype

    # Materialized path 1: lane-dense blocked (auto-pipelined) copy.
    y_blk = resnet_forward(x, materialize=True)
    jax.block_until_ready(y_blk)
    assert y_blk.shape == x.shape and y_blk.dtype == x.dtype
    assert bool(jnp.all(y_blk == x))

    # Materialized path 2: pure HBM->HBM chunked-DMA copy (no VMEM staging).
    y_dma = resnet_forward(x, materialize=True, copy_mode="dma")
    jax.block_until_ready(y_dma)
    assert bool(jnp.all(y_dma == x))

    # Padding branch: element count not a multiple of 128 (pads, copies, slices).
    x_odd = jax.random.normal(jax.random.PRNGKey(1), (3, 5, 7),
                              dtype=jnp.float32)
    y_odd = resnet_forward(x_odd, materialize=True)
    jax.block_until_ready(y_odd)
    assert bool(jnp.all(y_odd == x_odd))

    # bf16 branch: sublane packing multiple of 16.
    x_bf16 = x.astype(jnp.bfloat16)
    y_bf16 = resnet_forward(x_bf16, materialize=True)
    jax.block_until_ready(y_bf16)
    assert bool(jnp.all(y_bf16 == x_bf16))

    assert bool(jnp.all(y_fast == x))
    print("KERNEL_OK")
</pallas_src>

<mosaic_0001>
module attributes {stable_mosaic.version = 11 : i64} {
  func.func @_copy_kernel(%arg0: i32, %arg1: memref<8x256xf32, #tpu.memory_space<vmem>>, %arg2: memref<8x256xf32, #tpu.memory_space<vmem>>) attributes {dimension_semantics = [#tpu.dimension_semantics<parallel>], iteration_bounds = array<i64: 1>, scalar_prefetch = 0 : i64, scratch_operands = 0 : i64, tpu.core_type = #tpu.core_type<tc>, window_params = [{transform_indices = @transform_0, window_bounds = array<i64: 8, 256>}, {transform_indices = @transform_1, window_bounds = array<i64: 8, 256>}]} {
    %c0 = arith.constant 0 : index
    %c0_0 = arith.constant 0 : index
    %0 = vector.load %arg1[%c0, %c0_0] : memref<8x256xf32, #tpu.memory_space<vmem>>, vector<8x256xf32>
    %c0_1 = arith.constant 0 : index
    %c0_2 = arith.constant 0 : index
    %1 = vector.load %arg2[%c0_1, %c0_2] : memref<8x256xf32, #tpu.memory_space<vmem>>, vector<8x256xf32>
    tpu.vector_store %arg2[%c0_1, %c0_2], %0 {strides = array<i32>} : memref<8x256xf32, #tpu.memory_space<vmem>>, vector<8x256xf32>,
    return
  }
  func.func @transform_0(%arg0: i32) -> (i32, i32) {
    %c0_i32 = arith.constant 0 : i32
    %c0_i32_0 = arith.constant 0 : i32
    return %arg0, %c0_i32 : i32, i32
  }
  func.func @transform_1(%arg0: i32) -> (i32, i32) {
    %c0_i32 = arith.constant 0 : i32
    %c0_i32_0 = arith.constant 0 : i32
    return %arg0, %c0_i32 : i32, i32
  }
}

</mosaic_0001>

<llo_original>
// kernel: tpu_custom_call.1
$region0: #{tpu_custom_call.1}
  #allocation0 [shape = 'u32[]', space=smem, size = 0x4, offset = 0x4, fixed_abs, tag = 'smem constant byte address 0x4 - core index']
  #allocation1 [shape = 'u32[144,128]{1,0:T(1,128)}', space=vmem, size = 0x12000, scoped, tag = 'internal scratch']
  %s0 = inlined_call_operand.hbm [shape: f32[8,256], index: 0, kind: input, shape index: {}]
  %s1 = inlined_call_operand.hbm [shape: f32[8,256], index: 1, kind: output, shape index: {}]
  %s2 = sld [smem:[#allocation0]]
  $region18: #{tpu_custom_call.1} parent=0
    _
  %s4 = ssub.s32 1, %s2
  %s5 = scalar_select 0, %s4, %s2
  $region1: #{tpu_custom_call.1} parent=0
    #allocation2 [shape = 'u8[8192]{0}', space=vmem, size = 0x2000, scoped, tag = 'input window, operand 0, single buffered']
    #allocation3 [shape = 's32[1]{0}', space=sflag, size = 0x4, scoped, tag = 'scoped memory for tpu_custom_call.1']
    #allocation4 [shape = 's32[1]{0}', space=sflag, size = 0x4, scoped, tag = 'scoped memory for tpu_custom_call.1']
    #allocation5 [shape = 'u8[8192]{0}', space=vmem, size = 0x2000, scoped, tag = 'output window, operand 0, single buffered']
    %6 = vsyncpa [#allocation3], 0
    %7 = vsyncpa [#allocation4], 0
    // Predicated region
    $region2: #{tpu_custom_call.1} parent=1 // pred_check
      _
    $region3: #{tpu_custom_call.1} parent=1 // pred_check_branch
      %9 = sbr.rel (0) target = $region5
    $region4: #{tpu_custom_call.1} parent=1 // pred_region
      %s11 = ssub.s32 256, 256
      %12 = vsyncadd [#allocation3], %s11
      %s14 = sshll.u32 [#allocation2], 4
      %s15 = int_to_ptr.vmem [resolvable:$true] %s14
      %17 = dma.hbm_to_vmem [thread:$0]  %s0, 256, %s15, [#allocation3]
    $region5: #{tpu_custom_call.1} parent=1 // pred_fallthru
      _
    // Predicated region
    $region6: #{tpu_custom_call.1} parent=1 // pred_check
      _
    $region7: #{tpu_custom_call.1} parent=1 // pred_check_branch
      %19 = sbr.rel (0) target = $region9
    $region8: #{tpu_custom_call.1} parent=1 // pred_region
      %20 = dma.done [#allocation3], 256
    $region9: #{tpu_custom_call.1} parent=1 // pred_fallthru
      _
    %v21 = vld [vmem:[#allocation2] sm:$0xff]
    %v22 = vld [vmem:[#allocation2 + $0x8] sm:$0xff]
    %23 = vst [vmem:[#allocation5] sm:$0xff] %v21
    %24 = vst [vmem:[#allocation5 + $0x8] sm:$0xff] %v22
    // Predicated region
    $region10: #{tpu_custom_call.1} parent=1 // pred_check
      _
    $region11: #{tpu_custom_call.1} parent=1 // pred_check_branch
      %26 = sbr.rel (0) target = $region13
    $region12: #{tpu_custom_call.1} parent=1 // pred_region
      %s28 = ssub.s32 256, 256
      %29 = vsyncadd [#allocation4], %s28
      %s31 = sshll.u32 [#allocation5], 4
      %s32 = int_to_ptr.vmem [resolvable:$true] %s31
      %34 = dma.vmem_to_hbm [thread:$0]  %s32, 256, %s1, [#allocation4]
    $region13: #{tpu_custom_call.1} parent=1 // pred_fallthru
      _
    // Predicated region
    $region14: #{tpu_custom_call.1} parent=1 // pred_check
      _
    $region15: #{tpu_custom_call.1} parent=1 // pred_check_branch
      %36 = sbr.rel (0) target = $region17
    $region16: #{tpu_custom_call.1} parent=1 // pred_region
      %37 = dma.done [#allocation4], 256
    $region17: #{tpu_custom_call.1} parent=1 // pred_fallthru
      _
    %38 = vsyncpa [#allocation3], 1
    %39 = vsyncpa [#allocation4], 1

</llo_original>
